<compile_context>
chip_gen: v5e
topology: v5e:2x2
jax: 0.10.0
libtpu: 0.0.40
codegen_flags: <defaults>
</compile_context>

<pallas_src>
import functools
import math

import jax
import jax.numpy as jnp
from jax.experimental import pallas as pl
from jax.experimental.pallas import tpu as pltpu


def _round_up(v, m):
    return (v + m - 1) // m * m


def _pad_dim(d):
    # Lane-dense 128 for small dims (e.g. output_size==1 heads), 256 otherwise
    # (MXU friendly on v6e/v7x, still a multiple of 128 for v5e).
    return 128 if d <= 128 else _round_up(d, 256)


def _pick_feature_tile(total, target):
    for t in (target, 512, 384, 256, 128):
        if 0 < t <= total and total % t == 0:
            return t
    return total


def _vmem_capacity_bytes():
    try:
        info = pltpu.get_tpu_info()
        for attr in ("vmem_capacity_bytes", "vmem_bytes", "vmem_capacity"):
            v = getattr(info, attr, None)
            if v:
                return int(v)
    except Exception:
        pass
    return 64 * 2**20  # conservative fallback (v7x physical size)


def _vmem_budget_bytes():
    # Single generation-aware budget used for BOTH the fused/tiled decision and
    # vmem_limit_bytes (so they can never disagree).  ~25% headroom for the
    # compiler's internal scratch.
    return max(32 * 2**20, _vmem_capacity_bytes() * 3 // 4)


# ----------------------------------------------------------------------------
# Parameter preparation (done once, outside the forward hot path)
# ----------------------------------------------------------------------------
def init_mllinear_params(key, linear_size, output_size, dtype=jnp.float32):
    """Deterministic init mirroring MLLinear.__init__ (torch (out,in) weights)."""
    params = []
    for in_s, out_s in zip(linear_size[:-1], linear_size[1:]):
        key, kw, kb = jax.random.split(key, 3)
        limit = math.sqrt(6.0 / (in_s + out_s))              # xavier_uniform
        w = jax.random.uniform(kw, (out_s, in_s), dtype, -limit, limit)
        b_lim = 1.0 / math.sqrt(in_s)
        b = jax.random.uniform(kb, (out_s,), dtype, -b_lim, b_lim)
        params.append((w, b))
    in_s, out_s = linear_size[-1], output_size
    key, kw, kb = jax.random.split(key, 3)
    limit = math.sqrt(6.0 / (in_s + out_s))
    w_out = jax.random.uniform(kw, (out_s, in_s), dtype, -limit, limit)
    b_lim = 1.0 / math.sqrt(in_s)
    b_out = jax.random.uniform(kb, (out_s,), dtype, -b_lim, b_lim)
    return params, (w_out, b_out)


def prepare_params(hidden_params, output_params, compute_dtype=jnp.bfloat16):
    """Transpose to (K, N), pad feature dims (128/256 rule), cast weights to the
    MXU compute dtype.  Biases stay f32.  Done once (hoisted out of forward)."""
    layers = list(hidden_params) + [output_params]
    prepared = []
    for w, b in layers:
        out_s, in_s = w.shape
        k_pad = _pad_dim(in_s)
        n_pad = _pad_dim(out_s)
        w_t = jnp.zeros((k_pad, n_pad), compute_dtype)
        w_t = w_t.at[:in_s, :out_s].set(jnp.asarray(w).T.astype(compute_dtype))
        b_row = jnp.zeros((1, n_pad), jnp.float32)
        b_row = b_row.at[0, :out_s].set(jnp.asarray(b).astype(jnp.float32))
        prepared.append((w_t, b_row))
    return prepared


def _resident_spec(shape, index_map, single_buffer):
    """BlockSpec for a block whose index_map is constant across the grid.
    Requests single-buffering (no wasted second VMEM copy) when available."""
    if single_buffer:
        try:
            return pl.BlockSpec(shape, index_map, pipeline_mode=pl.Buffered(1))
        except Exception:
            pass
    return pl.BlockSpec(shape, index_map)


# ----------------------------------------------------------------------------
# Fused whole-MLP kernel (intermediates stay in VMEM / vregs)
# ----------------------------------------------------------------------------
def _fused_mlp_kernel(x_ref, *refs):
    """refs = (w0, b0, w1, b1, ..., w_out, b_out, o_ref)."""
    o_ref = refs[-1]
    param_refs = refs[:-1]
    n_layers = len(param_refs) // 2
    h = x_ref[...]
    for layer in range(n_layers):
        w = param_refs[2 * layer][...]          # (K_pad, N_pad), compute dtype
        b = param_refs[2 * layer + 1][...]      # (1, N_pad), f32
        acc = jnp.dot(h.astype(w.dtype), w, preferred_element_type=jnp.float32)
        acc = acc + b                            # f32 epilogue (v5e-safe)
        if layer < n_layers - 1:
            # Keep the live intermediate in the compute dtype (MXU sees the same
            # bits either way; halves vreg/VMEM pressure at large tm).
            h = jnp.maximum(acc, 0.0).astype(w.dtype)
        else:
            h = acc
    o_ref[...] = h.astype(o_ref.dtype)


def _select_fused_tm(M, prepared, budget):
    """Largest batch tile (cap 512) whose fused footprint fits the VMEM budget.
    Returns None if the fused path does not fit even at tm=8."""
    k_pad = prepared[0][0].shape[0]
    n_out = prepared[-1][0].shape[1]
    widest = max(w.shape[1] for w, _ in prepared)
    weight_bytes = sum(w.size * w.dtype.itemsize + b.size * b.dtype.itemsize
                       for w, b in prepared)          # single-buffered residents
    # per batch-row: double-buffered x (f32) + double-buffered out (f32)
    # + f32 accumulator + compute-dtype intermediate.
    per_row = 2 * k_pad * 4 + 2 * n_out * 4 + widest * 4 + widest * 2
    avail = budget - weight_bytes - (6 << 20)          # compiler headroom
    if avail < per_row * 8:
        return None
    m8 = _round_up(max(M, 1), 8)
    tm = min(512, m8, max(8, (avail // per_row) // 8 * 8))
    # v7x has 2 TensorCores sharded along "parallel" grid axes: make sure the
    # batch axis has at least 2 steps when there is anything to split.
    if m8 >= 16 and m8 <= tm:
        tm = max(8, _round_up((m8 + 1) // 2, 8))
    return tm


def _fused_forward(x, prepared, *, tm, vmem_limit, out_dtype=jnp.float32,
                   single_buffer_weights=True):
    M, K = x.shape
    k_pad = prepared[0][0].shape[0]
    n_out = prepared[-1][0].shape[1]
    m_pad = _round_up(M, tm)
    x_pad = x
    if (m_pad, k_pad) != (M, K):
        x_pad = jnp.zeros((m_pad, k_pad), x.dtype).at[:M, :K].set(x)

    in_specs = [pl.BlockSpec((tm, k_pad), lambda i: (i, 0))]
    flat_args = [x_pad]
    for w_t, b_row in prepared:
        kp, np_ = w_t.shape
        in_specs.append(_resident_spec((kp, np_), lambda i: (0, 0),
                                       single_buffer_weights))
        in_specs.append(_resident_spec((1, np_), lambda i: (0, 0),
                                       single_buffer_weights))
        flat_args += [w_t, b_row]

    return pl.pallas_call(
        _fused_mlp_kernel,
        out_shape=jax.ShapeDtypeStruct((m_pad, n_out), out_dtype),
        grid=(m_pad // tm,),
        in_specs=in_specs,
        out_specs=pl.BlockSpec((tm, n_out), lambda i: (i, 0)),
        compiler_params=pltpu.CompilerParams(
            dimension_semantics=("parallel",),        # v7x: shard batch over 2 TCs
            vmem_limit_bytes=int(vmem_limit)),
    )(*flat_args)


# ----------------------------------------------------------------------------
# Tiled per-layer fallback (for layer stacks too large to keep resident)
# ----------------------------------------------------------------------------
def _linear_resident_k_kernel(x_ref, w_ref, b_ref, o_ref, *, apply_relu):
    # K resident: single full-K dot, bias + ReLU epilogue inline, no scratch.
    acc = jnp.dot(x_ref[...].astype(w_ref.dtype), w_ref[...],
                  preferred_element_type=jnp.float32)
    acc = acc + b_ref[...]
    if apply_relu:
        acc = jnp.maximum(acc, 0.0)
    o_ref[...] = acc.astype(o_ref.dtype)


def _linear_resident_k(x_pad, w_t, b_row, *, apply_relu, tm, tn, out_dtype,
                       vmem_limit):
    m_pad, k_pad = x_pad.shape
    _, n_pad = w_t.shape
    return pl.pallas_call(
        functools.partial(_linear_resident_k_kernel, apply_relu=apply_relu),
        out_shape=jax.ShapeDtypeStruct((m_pad, n_pad), out_dtype),
        grid=(m_pad // tm, n_pad // tn),
        in_specs=[
            pl.BlockSpec((tm, k_pad), lambda i, j: (i, 0)),   # x: fetched once per i
            pl.BlockSpec((k_pad, tn), lambda i, j: (0, j)),   # weights stream over j
            pl.BlockSpec((1, tn), lambda i, j: (0, j)),
        ],
        out_specs=pl.BlockSpec((tm, tn), lambda i, j: (i, j)),
        compiler_params=pltpu.CompilerParams(
            dimension_semantics=("parallel", "parallel"),
            vmem_limit_bytes=int(vmem_limit)),
    )(x_pad, w_t, b_row)


def _linear_k_grid_kernel(x_ref, w_ref, b_ref, o_ref, acc_ref, *, apply_relu):
    k = pl.program_id(2)

    @pl.when(k == 0)
    def _init():
        # Fold bias into the accumulator init instead of a post-dot add.
        acc_ref[...] = jnp.broadcast_to(b_ref[...], acc_ref.shape)

    acc_ref[...] += jnp.dot(x_ref[...].astype(w_ref.dtype), w_ref[...],
                            preferred_element_type=jnp.float32)

    @pl.when(k == pl.num_programs(2) - 1)
    def _finalize():
        r = acc_ref[...]
        if apply_relu:
            r = jnp.maximum(r, 0.0)
        o_ref[...] = r.astype(o_ref.dtype)


def _linear_k_grid(x_pad, w_t, b_row, *, apply_relu, tm, tn, tk, out_dtype,
                   vmem_limit):
    m_pad, k_pad = x_pad.shape
    _, n_pad = w_t.shape
    return pl.pallas_call(
        functools.partial(_linear_k_grid_kernel, apply_relu=apply_relu),
        out_shape=jax.ShapeDtypeStruct((m_pad, n_pad), out_dtype),
        grid=(m_pad // tm, n_pad // tn, k_pad // tk),
        in_specs=[
            pl.BlockSpec((tm, tk), lambda i, j, k: (i, k)),
            pl.BlockSpec((tk, tn), lambda i, j, k: (k, j)),
            pl.BlockSpec((1, tn), lambda i, j, k: (0, j)),
        ],
        out_specs=pl.BlockSpec((tm, tn), lambda i, j, k: (i, j)),
        scratch_shapes=[pltpu.VMEM((tm, tn), jnp.float32)],
        compiler_params=pltpu.CompilerParams(
            dimension_semantics=("parallel", "parallel", "arbitrary"),
            vmem_limit_bytes=int(vmem_limit)),
    )(x_pad, w_t, b_row)


def _tiled_forward(x, prepared, *, budget, force_k_grid=False):
    M = x.shape[0]
    n_layers = len(prepared)
    inter_dtype = prepared[0][0].dtype      # chain hidden activations in bf16
    headroom = 4 << 20

    # Big batch tile (cap 512) so streaming the weights is compute-bound;
    # shrink only if the per-layer resident-K blocks would not fit VMEM.
    tm = min(512, _round_up(max(M, 1), 8))
    tn_target = 512 if budget >= (80 << 20) else 256
    for w_t, _ in prepared:
        k_pad, n_pad = w_t.shape
        tn = _pick_feature_tile(n_pad, tn_target)
        wb = w_t.dtype.itemsize

        def need(tm_, k_pad=k_pad, tn=tn, wb=wb):
            return (2 * tm_ * k_pad * 4 + 2 * k_pad * tn * wb
                    + 2 * tm_ * tn * 4 + 2 * tn * 4 + headroom)

        while tm > 8 and need(tm) > budget:
            tm = max(8, (tm // 2) // 8 * 8)
    tm = max(tm, 8)

    m_pad = _round_up(M, tm)
    k_pad0 = prepared[0][0].shape[0]
    h = x
    if h.shape != (m_pad, k_pad0):
        h = jnp.zeros((m_pad, k_pad0), x.dtype).at[:M, :x.shape[1]].set(x)

    for idx, (w_t, b_row) in enumerate(prepared):
        k_pad, n_pad = w_t.shape
        tn = _pick_feature_tile(n_pad, tn_target)
        last = idx == n_layers - 1
        out_dtype = jnp.float32 if last else inter_dtype    # bf16 inter-layer HBM
        wb = w_t.dtype.itemsize
        resident_need = (2 * tm * k_pad * h.dtype.itemsize + 2 * k_pad * tn * wb
                         + 2 * tm * tn * 4 + 2 * tn * 4 + headroom)
        if (not force_k_grid) and resident_need <= budget:
            h = _linear_resident_k(h, w_t, b_row, apply_relu=not last,
                                   tm=tm, tn=tn, out_dtype=out_dtype,
                                   vmem_limit=budget)
        else:
            tk = _pick_feature_tile(k_pad, tn_target)
            h = _linear_k_grid(h, w_t, b_row, apply_relu=not last,
                               tm=tm, tn=tn, tk=tk, out_dtype=out_dtype,
                               vmem_limit=budget)
    return h


# ----------------------------------------------------------------------------
# Forward
# ----------------------------------------------------------------------------
def mllinear_forward(x, prepared, output_size, *, force_tiled=False,
                     force_k_grid=False, vmem_budget=None):
    """MLLinear forward.  `prepared` comes from prepare_params (padded, (K,N))."""
    M = x.shape[0]
    budget = int(vmem_budget) if vmem_budget is not None else _vmem_budget_bytes()

    tm_fused = None
    if not (force_tiled or force_k_grid):
        tm_fused = _select_fused_tm(M, prepared, budget)

    if tm_fused is not None:
        try:
            out = _fused_forward(x, prepared, tm=tm_fused, vmem_limit=budget,
                                 single_buffer_weights=True)
        except Exception:
            # Older JAX without pl.Buffered(1) support on resident blocks.
            out = _fused_forward(x, prepared, tm=tm_fused, vmem_limit=budget,
                                 single_buffer_weights=False)
    else:
        out = _tiled_forward(x, prepared, budget=budget,
                             force_k_grid=force_k_grid)

    out = out[:M, :output_size]
    if output_size == 1:              # torch.squeeze(out, -1)
        out = out[:, 0]
    return out


# ----------------------------------------------------------------------------
# Pure-JAX reference
# ----------------------------------------------------------------------------
def mllinear_reference(x, hidden_params, output_params):
    hi = jax.lax.Precision.HIGHEST
    h = x
    for w, b in hidden_params:
        h = jnp.maximum(jnp.dot(h, w.T, precision=hi) + b, 0.0)
    w_out, b_out = output_params
    out = jnp.dot(h, w_out.T, precision=hi) + b_out
    if out.shape[-1] == 1:
        out = out[..., 0]
    return out


if __name__ == "__main__":
    # ---- Test 1: fused path, small MLLinear (linear_size=[32,16], out=1) ----
    batch = 8
    linear_size = [32, 16]
    output_size = 1

    key = jax.random.PRNGKey(0)
    key, kx = jax.random.split(key)
    x = jax.random.normal(kx, (batch, linear_size[0]), jnp.float32)
    hidden_params, output_params = init_mllinear_params(key, linear_size, output_size)
    ref = mllinear_reference(x, hidden_params, output_params)

    # bf16 MXU compute, f32 accumulate/epilogue (default; accuracy tradeoff).
    prepared_bf16 = prepare_params(hidden_params, output_params, jnp.bfloat16)
    out_bf16 = jax.block_until_ready(mllinear_forward(x, prepared_bf16, output_size))
    assert out_bf16.shape == (batch,), out_bf16.shape
    assert jnp.allclose(out_bf16, ref, atol=1e-1, rtol=1e-1), (out_bf16, ref)

    # f32 compute variant for sensitive heads (tighter check).
    prepared_f32 = prepare_params(hidden_params, output_params, jnp.float32)
    out_f32 = jax.block_until_ready(mllinear_forward(x, prepared_f32, output_size))
    assert out_f32.shape == (batch,), out_f32.shape
    assert jnp.allclose(out_f32, ref, atol=2e-2, rtol=2e-2), (out_f32, ref)

    # ---- Test 2: tiled fallback (resident-K), non-aligned dims, out>1 ----
    batch2 = 16
    linear_size2 = [300, 80]
    output_size2 = 5
    key, kx2 = jax.random.split(key)
    x2 = jax.random.normal(kx2, (batch2, linear_size2[0]), jnp.float32)
    hidden2, outp2 = init_mllinear_params(key, linear_size2, output_size2)
    prepared2 = prepare_params(hidden2, outp2, jnp.float32)
    ref2 = mllinear_reference(x2, hidden2, outp2)

    y2 = jax.block_until_ready(
        mllinear_forward(x2, prepared2, output_size2, force_tiled=True))
    assert y2.shape == (batch2, output_size2), y2.shape
    assert jnp.allclose(y2, ref2, atol=2e-2, rtol=2e-2), (y2, ref2)

    # ---- Test 3: tiled fallback with K gridded (accumulator kernel) ----
    y3 = jax.block_until_ready(
        mllinear_forward(x2, prepared2, output_size2, force_k_grid=True))
    assert y3.shape == (batch2, output_size2), y3.shape
    assert jnp.allclose(y3, ref2, atol=2e-2, rtol=2e-2), (y3, ref2)

    print("KERNEL_OK")
</pallas_src>

<mosaic_0001>
module attributes {stable_mosaic.version = 11 : i64} {
  func.func @_fused_mlp_kernel(%arg0: i32, %arg1: memref<8x128xf32, #tpu.memory_space<vmem>>, %arg2: memref<128x128xbf16, #tpu.memory_space<vmem>>, %arg3: memref<1x128xf32, #tpu.memory_space<vmem>>, %arg4: memref<128x128xbf16, #tpu.memory_space<vmem>>, %arg5: memref<1x128xf32, #tpu.memory_space<vmem>>, %arg6: memref<8x128xf32, #tpu.memory_space<vmem>>) attributes {dimension_semantics = [#tpu.dimension_semantics<parallel>], iteration_bounds = array<i64: 1>, scalar_prefetch = 0 : i64, scratch_operands = 0 : i64, tpu.core_type = #tpu.core_type<tc>, window_params = [{transform_indices = @transform_0, window_bounds = array<i64: 8, 128>}, {pipeline_mode = #tpu.pipeline_mode<synchronous>, transform_indices = @transform_1, window_bounds = array<i64: 128, 128>}, {pipeline_mode = #tpu.pipeline_mode<synchronous>, transform_indices = @transform_2, window_bounds = array<i64: 1, 128>}, {pipeline_mode = #tpu.pipeline_mode<synchronous>, transform_indices = @transform_3, window_bounds = array<i64: 128, 128>}, {pipeline_mode = #tpu.pipeline_mode<synchronous>, transform_indices = @transform_4, window_bounds = array<i64: 1, 128>}, {transform_indices = @transform_5, window_bounds = array<i64: 8, 128>}]} {
    %c0 = arith.constant 0 : index
    %c0_0 = arith.constant 0 : index
    %0 = vector.load %arg1[%c0, %c0_0] : memref<8x128xf32, #tpu.memory_space<vmem>>, vector<8x128xf32>
    %c0_1 = arith.constant 0 : index
    %c0_2 = arith.constant 0 : index
    %1 = vector.load %arg2[%c0_1, %c0_2] : memref<128x128xbf16, #tpu.memory_space<vmem>>, vector<128x128xbf16>
    %c0_3 = arith.constant 0 : index
    %c0_4 = arith.constant 0 : index
    %2 = vector.load %arg3[%c0_3, %c0_4] : memref<1x128xf32, #tpu.memory_space<vmem>>, vector<1x128xf32>
    %3 = arith.truncf %0 : vector<8x128xf32> to vector<8x128xbf16>
    %cst = arith.constant dense<0.000000e+00> : vector<8x128xf32>
    %4 = tpu.matmul %3, %1, %cst {dimension_numbers = #tpu.dot_dimension_numbers<[1], [0], [0], [1], [0, 0, 1, 1], [], []>} : vector<8x128xbf16>, vector<128x128xbf16>, vector<8x128xf32> -> vector<8x128xf32>
    %5 = vector.broadcast %2 : vector<1x128xf32> to vector<8x128xf32>
    %6 = arith.addf %4, %5 : vector<8x128xf32>
    %cst_5 = arith.constant 0.000000e+00 : f32
    %7 = vector.broadcast %cst_5 : f32 to vector<8x128xf32>
    %8 = arith.maximumf %6, %7 : vector<8x128xf32>
    %9 = arith.truncf %8 : vector<8x128xf32> to vector<8x128xbf16>
    %c0_6 = arith.constant 0 : index
    %c0_7 = arith.constant 0 : index
    %10 = vector.load %arg4[%c0_6, %c0_7] : memref<128x128xbf16, #tpu.memory_space<vmem>>, vector<128x128xbf16>
    %c0_8 = arith.constant 0 : index
    %c0_9 = arith.constant 0 : index
    %11 = vector.load %arg5[%c0_8, %c0_9] : memref<1x128xf32, #tpu.memory_space<vmem>>, vector<1x128xf32>
    %cst_10 = arith.constant dense<0.000000e+00> : vector<8x128xf32>
    %12 = tpu.matmul %9, %10, %cst_10 {dimension_numbers = #tpu.dot_dimension_numbers<[1], [0], [0], [1], [0, 0, 1, 1], [], []>} : vector<8x128xbf16>, vector<128x128xbf16>, vector<8x128xf32> -> vector<8x128xf32>
    %13 = vector.broadcast %11 : vector<1x128xf32> to vector<8x128xf32>
    %14 = arith.addf %12, %13 : vector<8x128xf32>
    %c0_11 = arith.constant 0 : index
    %c0_12 = arith.constant 0 : index
    %15 = vector.load %arg6[%c0_11, %c0_12] : memref<8x128xf32, #tpu.memory_space<vmem>>, vector<8x128xf32>
    tpu.vector_store %arg6[%c0_11, %c0_12], %14 {strides = array<i32>} : memref<8x128xf32, #tpu.memory_space<vmem>>, vector<8x128xf32>,
    return
  }
  func.func @transform_0(%arg0: i32) -> (i32, i32) {
    %c0_i32 = arith.constant 0 : i32
    %c0_i32_0 = arith.constant 0 : i32
    return %arg0, %c0_i32 : i32, i32
  }
  func.func @transform_1(%arg0: i32) -> (i32, i32) {
    %c0_i32 = arith.constant 0 : i32
    %c0_i32_0 = arith.constant 0 : i32
    %c0_i32_1 = arith.constant 0 : i32
    return %c0_i32, %c0_i32_0 : i32, i32
  }
  func.func @transform_2(%arg0: i32) -> (i32, i32) {
    %c0_i32 = arith.constant 0 : i32
    %c0_i32_0 = arith.constant 0 : i32
    %c0_i32_1 = arith.constant 0 : i32
    return %c0_i32, %c0_i32_0 : i32, i32
  }
  func.func @transform_3(%arg0: i32) -> (i32, i32) {
    %c0_i32 = arith.constant 0 : i32
    %c0_i32_0 = arith.constant 0 : i32
    %c0_i32_1 = arith.constant 0 : i32
    return %c0_i32, %c0_i32_0 : i32, i32
  }
  func.func @transform_4(%arg0: i32) -> (i32, i32) {
    %c0_i32 = arith.constant 0 : i32
    %c0_i32_0 = arith.constant 0 : i32
    %c0_i32_1 = arith.constant 0 : i32
    return %c0_i32, %c0_i32_0 : i32, i32
  }
  func.func @transform_5(%arg0: i32) -> (i32, i32) {
    %c0_i32 = arith.constant 0 : i32
    %c0_i32_0 = arith.constant 0 : i32
    return %arg0, %c0_i32 : i32, i32
  }
}

module attributes {stable_mosaic.version = 11 : i64} {
  func.func @_fused_mlp_kernel(%arg0: i32, %arg1: memref<8x128xf32, #tpu.memory_space<vmem>>, %arg2: memref<128x128xbf16, #tpu.memory_space<vmem>>, %arg3: memref<1x128xf32, #tpu.memory_space<vmem>>, %arg4: memref<128x128xbf16, #tpu.memory_space<vmem>>, %arg5: memref<1x128xf32, #tpu.memory_space<vmem>>, %arg6: memref<8x128xf32, #tpu.memory_space<vmem>>) attributes {dimension_semantics = [#tpu.dimension_semantics<parallel>], iteration_bounds = array<i64: 1>, scalar_prefetch = 0 : i64, scratch_operands = 0 : i64, tpu.core_type = #tpu.core_type<tc>, window_params = [{transform_indices = @transform_0, window_bounds = array<i64: 8, 128>}, {pipeline_mode = #tpu.pipeline_mode<synchronous>, transform_indices = @transform_1, window_bounds = array<i64: 128, 128>}, {pipeline_mode = #tpu.pipeline_mode<synchronous>, transform_indices = @transform_2, window_bounds = array<i64: 1, 128>}, {pipeline_mode = #tpu.pipeline_mode<synchronous>, transform_indices = @transform_3, window_bounds = array<i64: 128, 128>}, {pipeline_mode = #tpu.pipeline_mode<synchronous>, transform_indices = @transform_4, window_bounds = array<i64: 1, 128>}, {transform_indices = @transform_5, window_bounds = array<i64: 8, 128>}]} {
    %c0 = arith.constant 0 : index
    %c0_0 = arith.constant 0 : index
    %0 = vector.load %arg1[%c0, %c0_0] : memref<8x128xf32, #tpu.memory_space<vmem>>, vector<8x128xf32>
    %c0_1 = arith.constant 0 : index
    %c0_2 = arith.constant 0 : index
    %1 = vector.load %arg2[%c0_1, %c0_2] : memref<128x128xbf16, #tpu.memory_space<vmem>>, vector<128x128xbf16>
    %c0_3 = arith.constant 0 : index
    %c0_4 = arith.constant 0 : index
    %2 = vector.load %arg3[%c0_3, %c0_4] : memref<1x128xf32, #tpu.memory_space<vmem>>, vector<1x128xf32>
    %3 = arith.truncf %0 : vector<8x128xf32> to vector<8x128xbf16>
    %cst = arith.constant dense<0.000000e+00> : vector<8x128xf32>
    %4 = tpu.matmul %3, %1, %cst {dimension_numbers = #tpu.dot_dimension_numbers<[1], [0], [0], [1], [0, 0, 1, 1], [], []>} : vector<8x128xbf16>, vector<128x128xbf16>, vector<8x128xf32> -> vector<8x128xf32>
    %5 = vector.broadcast %2 : vector<1x128xf32> to vector<8x128xf32>
    %6 = arith.addf %4, %5 : vector<8x128xf32>
    %cst_5 = arith.constant 0.000000e+00 : f32
    %7 = vector.broadcast %cst_5 : f32 to vector<8x128xf32>
    %8 = arith.maximumf %6, %7 : vector<8x128xf32>
    %9 = arith.truncf %8 : vector<8x128xf32> to vector<8x128xbf16>
    %c0_6 = arith.constant 0 : index
    %c0_7 = arith.constant 0 : index
    %10 = vector.load %arg4[%c0_6, %c0_7] : memref<128x128xbf16, #tpu.memory_space<vmem>>, vector<128x128xbf16>
    %c0_8 = arith.constant 0 : index
    %c0_9 = arith.constant 0 : index
    %11 = vector.load %arg5[%c0_8, %c0_9] : memref<1x128xf32, #tpu.memory_space<vmem>>, vector<1x128xf32>
    %cst_10 = arith.constant dense<0.000000e+00> : vector<8x128xf32>
    %12 = tpu.matmul %9, %10, %cst_10 {dimension_numbers = #tpu.dot_dimension_numbers<[1], [0], [0], [1], [0, 0, 1, 1], [], []>} : vector<8x128xbf16>, vector<128x128xbf16>, vector<8x128xf32> -> vector<8x128xf32>
    %13 = vector.broadcast %11 : vector<1x128xf32> to vector<8x128xf32>
    %14 = arith.addf %12, %13 : vector<8x128xf32>
    %c0_11 = arith.constant 0 : index
    %c0_12 = arith.constant 0 : index
    %15 = vector.load %arg6[%c0_11, %c0_12] : memref<8x128xf32, #tpu.memory_space<vmem>>, vector<8x128xf32>
    tpu.vector_store %arg6[%c0_11, %c0_12], %14 {strides = array<i32>} : memref<8x128xf32, #tpu.memory_space<vmem>>, vector<8x128xf32>,
    return
  }
  func.func @transform_0(%arg0: i32) -> (i32, i32) {
    %c0_i32 = arith.constant 0 : i32
    %c0_i32_0 = arith.constant 0 : i32
    return %arg0, %c0_i32 : i32, i32
  }
  func.func @transform_1(%arg0: i32) -> (i32, i32) {
    %c0_i32 = arith.constant 0 : i32
    %c0_i32_0 = arith.constant 0 : i32
    %c0_i32_1 = arith.constant 0 : i32
    return %c0_i32, %c0_i32_0 : i32, i32
  }
  func.func @transform_2(%arg0: i32) -> (i32, i32) {
    %c0_i32 = arith.constant 0 : i32
    %c0_i32_0 = arith.constant 0 : i32
    %c0_i32_1 = arith.constant 0 : i32
    return %c0_i32, %c0_i32_0 : i32, i32
  }
  func.func @transform_3(%arg0: i32) -> (i32, i32) {
    %c0_i32 = arith.constant 0 : i32
    %c0_i32_0 = arith.constant 0 : i32
    %c0_i32_1 = arith.constant 0 : i32
    return %c0_i32, %c0_i32_0 : i32, i32
  }
  func.func @transform_4(%arg0: i32) -> (i32, i32) {
    %c0_i32 = arith.constant 0 : i32
    %c0_i32_0 = arith.constant 0 : i32
    %c0_i32_1 = arith.constant 0 : i32
    return %c0_i32, %c0_i32_0 : i32, i32
  }
  func.func @transform_5(%arg0: i32) -> (i32, i32) {
    %c0_i32 = arith.constant 0 : i32
    %c0_i32_0 = arith.constant 0 : i32
    return %arg0, %c0_i32 : i32, i32
  }
}

</mosaic_0001>

<llo_original>
// kernel: tpu_custom_call.1
$region0: #{tpu_custom_call.1}
  #allocation0 [shape = 'u32[]', space=smem, size = 0x4, offset = 0x4, fixed_abs, tag = 'smem constant byte address 0x4 - core index']
  #allocation1 [shape = 'u32[72,128]{1,0:T(1,128)}', space=vmem, size = 0x9000, scoped, tag = 'internal scratch']
  %s0 = inlined_call_operand.hbm [shape: f32[8,128], index: 0, kind: input, shape index: {}]
  %s1 = inlined_call_operand.hbm [shape: bf16[128,128], index: 1, kind: input, shape index: {}]
  %s2 = inlined_call_operand.vmem [shape: f32[1,128], index: 2, kind: input, shape index: {}]
  %s3 = inlined_call_operand.hbm [shape: bf16[128,128], index: 3, kind: input, shape index: {}]
  %s4 = inlined_call_operand.vmem [shape: f32[1,128], index: 4, kind: input, shape index: {}]
  %s5 = inlined_call_operand.hbm [shape: f32[8,128], index: 5, kind: output, shape index: {}]
  %s6 = sld [smem:[#allocation0]]
  $region42: #{tpu_custom_call.1} parent=0
    _
  %s8 = ssub.s32 1, %s6
  %s9 = scalar_select 0, %s8, %s6
  $region1: #{tpu_custom_call.1} parent=0
    #allocation2 [shape = 'u8[4096]{0}', space=vmem, size = 0x1000, scoped, tag = 'input window, operand 0, single buffered']
    #allocation3 [shape = 's32[1]{0}', space=sflag, size = 0x4, scoped, tag = 'scoped memory for tpu_custom_call.1']
    #allocation4 [shape = 's32[1]{0}', space=sflag, size = 0x4, scoped, tag = 'scoped memory for tpu_custom_call.1']
    #allocation5 [shape = 'u8[32768]{0}', space=vmem, size = 0x8000, scoped, tag = 'input window, operand 1, single buffered']
    #allocation6 [shape = 's32[1]{0}', space=sflag, size = 0x4, scoped, tag = 'scoped memory for tpu_custom_call.1']
    #allocation7 [shape = 'u8[32768]{0}', space=vmem, size = 0x8000, scoped, tag = 'input window, operand 3, single buffered']
    #allocation8 [shape = 'u8[4096]{0}', space=vmem, size = 0x1000, scoped, tag = 'output window, operand 0, single buffered']
    %10 = vsyncpa [#allocation3], 0
    %11 = vsyncpa [#allocation6], 0
    %12 = vsyncpa [#allocation4], 0
    // Predicated region
    $region2: #{tpu_custom_call.1} parent=1 // pred_check
      _
    $region3: #{tpu_custom_call.1} parent=1 // pred_check_branch
      %14 = sbr.rel (0) target = $region5
    $region4: #{tpu_custom_call.1} parent=1 // pred_region
      %16 = vsyncadd [#allocation3], 0
      %s18 = sshll.u32 %s0, 4
      %s19 = int_to_ptr.hbm [resolvable:$true] %s18
      %s20 = sshll.u32 [#allocation2], 4
      %s21 = int_to_ptr.vmem [resolvable:$true] %s20
      %23 = dma.hbm_to_vmem [thread:$0]  %s19, 128, %s21, [#allocation3]
    $region5: #{tpu_custom_call.1} parent=1 // pred_fallthru
      _
    // Predicated region
    $region6: #{tpu_custom_call.1} parent=1 // pred_check
      _
    $region7: #{tpu_custom_call.1} parent=1 // pred_check_branch
      %25 = sbr.rel (0) target = $region9
    $region8: #{tpu_custom_call.1} parent=1 // pred_region
      %27 = vsyncadd [#allocation6], 0
      %s28 = sshll.u32 %s1, 4
      %s29 = int_to_ptr.hbm [resolvable:$true] %s28
      %s30 = sshll.u32 [#allocation5], 4
      %s31 = int_to_ptr.vmem [resolvable:$true] %s30
      %36 = dma.hbm_to_vmem [thread:$0]  %s29, 1024, %s31, [#allocation6], 64, 64, 4
    $region9: #{tpu_custom_call.1} parent=1 // pred_fallthru
      _
    // Predicated region
    $region10: #{tpu_custom_call.1} parent=1 // pred_check
      _
    $region11: #{tpu_custom_call.1} parent=1 // pred_check_branch
      %38 = sbr.rel (0) target = $region13
    $region12: #{tpu_custom_call.1} parent=1 // pred_region
      _
    $region13: #{tpu_custom_call.1} parent=1 // pred_fallthru
      _
    // Predicated region
    $region14: #{tpu_custom_call.1} parent=1 // pred_check
      _
    $region15: #{tpu_custom_call.1} parent=1 // pred_check_branch
      %40 = sbr.rel (0) target = $region17
    $region16: #{tpu_custom_call.1} parent=1 // pred_region
      %42 = vsyncadd [#allocation6], 0
      %s43 = sshll.u32 %s3, 4
      %s44 = int_to_ptr.hbm [resolvable:$true] %s43
      %s45 = sshll.u32 [#allocation7], 4
      %s46 = int_to_ptr.vmem [resolvable:$true] %s45
      %51 = dma.hbm_to_vmem [thread:$0]  %s44, 1024, %s46, [#allocation6], 64, 64, 4
    $region17: #{tpu_custom_call.1} parent=1 // pred_fallthru
      _
    // Predicated region
    $region18: #{tpu_custom_call.1} parent=1 // pred_check
      _
    $region19: #{tpu_custom_call.1} parent=1 // pred_check_branch
      %53 = sbr.rel (0) target = $region21
    $region20: #{tpu_custom_call.1} parent=1 // pred_region
      _
    $region21: #{tpu_custom_call.1} parent=1 // pred_fallthru
      _
    // Predicated region
    $region22: #{tpu_custom_call.1} parent=1 // pred_check
      _
    $region23: #{tpu_custom_call.1} parent=1 // pred_check_branch
      %55 = sbr.rel (0) target = $region25
    $region24: #{tpu_custom_call.1} parent=1 // pred_region
      %57 = dma.done [#allocation3], 128
    $region25: #{tpu_custom_call.1} parent=1 // pred_fallthru
      _
    // Predicated region
    $region26: #{tpu_custom_call.1} parent=1 // pred_check
      _
    $region27: #{tpu_custom_call.1} parent=1 // pred_check_branch
      %59 = sbr.rel (0) target = $region29
    $region28: #{tpu_custom_call.1} parent=1 // pred_region
      %61 = dma.done [#allocation6], 1024
    $region29: #{tpu_custom_call.1} parent=1 // pred_fallthru
      _
    // Predicated region
    $region30: #{tpu_custom_call.1} parent=1 // pred_check
      _
    $region31: #{tpu_custom_call.1} parent=1 // pred_check_branch
      %63 = sbr.rel (0) target = $region33
    $region32: #{tpu_custom_call.1} parent=1 // pred_region
      %65 = dma.done [#allocation6], 1024
    $region33: #{tpu_custom_call.1} parent=1 // pred_fallthru
      _
    %v66 = vld [vmem:[#allocation2] sm:$0xff]
    %v67 = vld [vmem:[#allocation5] sm:$0xf]
    %v68 = vld [vmem:[#allocation5 + $0x4] sm:$0xf]
    %v69 = vld [vmem:[#allocation5 + $0x8] sm:$0xf]
    %v70 = vld [vmem:[#allocation5 + $0xc] sm:$0xf]
    %v71 = vld [vmem:[#allocation5 + $0x10] sm:$0xf]
    %v72 = vld [vmem:[#allocation5 + $0x14] sm:$0xf]
    %v73 = vld [vmem:[#allocation5 + $0x18] sm:$0xf]
    %v74 = vld [vmem:[#allocation5 + $0x1c] sm:$0xf]
    %v75 = vld [vmem:[#allocation5 + $0x20] sm:$0xf]
    %v76 = vld [vmem:[#allocation5 + $0x24] sm:$0xf]
    %v77 = vld [vmem:[#allocation5 + $0x28] sm:$0xf]
    %v78 = vld [vmem:[#allocation5 + $0x2c] sm:$0xf]
    %v79 = vld [vmem:[#allocation5 + $0x30] sm:$0xf]
    %v80 = vld [vmem:[#allocation5 + $0x34] sm:$0xf]
    %v81 = vld [vmem:[#allocation5 + $0x38] sm:$0xf]
    %v82 = vld [vmem:[#allocation5 + $0x3c] sm:$0xf]
    %v83 = vld [vmem:[%s2] sm:$0x1]
    %v84 = vpack.c.bf16 %v66, %v66
    %v86 = vperm.slane %v83, 0
    %v104 = vunpack.c.l.b16 %v67
    %v105 = vunpack.c.l.b16 %v68
    %v106 = vunpack.c.l.b16 %v69
    %v107 = vunpack.c.l.b16 %v70
    %v108 = vunpack.c.l.b16 %v71
    %v109 = vunpack.c.l.b16 %v72
    %v110 = vunpack.c.l.b16 %v73
    %v111 = vunpack.c.l.b16 %v74
    %v112 = vunpack.c.l.b16 %v75
    %v113 = vunpack.c.l.b16 %v76
    %v114 = vunpack.c.l.b16 %v77
    %v115 = vunpack.c.l.b16 %v78
    %v116 = vunpack.c.l.b16 %v79
    %v117 = vunpack.c.l.b16 %v80
    %v118 = vunpack.c.l.b16 %v81
    %v119 = vunpack.c.l.b16 %v82
    %v120 = vpack.c.b16 %v105, %v104
    %v121 = vpack.c.b16 %v107, %v106
    %v122 = vpack.c.b16 %v109, %v108
    %v123 = vpack.c.b16 %v111, %v110
    %v124 = vpack.c.b16 %v113, %v112
    %v125 = vpack.c.b16 %v115, %v114
    %v126 = vpack.c.b16 %v117, %v116
    %v127 = vpack.c.b16 %v119, %v118
    %136 = vmatpush.bf16.msra.mxu0 %v127
    %137 = vmatpush.bf16.msra.mxu0 %v126
    %138 = vmatpush.bf16.msra.mxu0 %v125
    %139 = vmatpush.bf16.msra.mxu0 %v124
    %140 = vmatpush.bf16.msra.mxu0 %v123
    %141 = vmatpush.bf16.msra.mxu0 %v122
    %142 = vmatpush.bf16.msra.mxu0 %v121
    %143 = vmatpush.bf16.msra.mxu0 %v120
    %144 = vmatmul.bf16.gmra.mxu0 %v84
    %v145 = vpop.f32.mrf.mxu0
    %v146 = vadd.f32 %v86, %v145
    %v147 = vpop.f32.mrf.mxu0
    %148 = vdwg.mxu0
    %v149 = vmax.f32 %v146, 0.0
    %v150 = vpack.c.bf16 %v149, %v149
    %v151 = vld [vmem:[#allocation7] sm:$0xf]
    %v152 = vld [vmem:[#allocation7 + $0x4] sm:$0xf]
    %v153 = vld [vmem:[#allocation7 + $0x8] sm:$0xf]
    %v154 = vld [vmem:[#allocation7 + $0xc] sm:$0xf]
    %v155 = vld [vmem:[#allocation7 + $0x10] sm:$0xf]
    %v156 = vld [vmem:[#allocation7 + $0x14] sm:$0xf]
    %v157 = vld [vmem:[#allocation7 + $0x18] sm:$0xf]
    %v158 = vld [vmem:[#allocation7 + $0x1c] sm:$0xf]
    %v159 = vld [vmem:[#allocation7 + $0x20] sm:$0xf]
    %v160 = vld [vmem:[#allocation7 + $0x24] sm:$0xf]
    %v161 = vld [vmem:[#allocation7 + $0x28] sm:$0xf]
    %v162 = vld [vmem:[#allocation7 + $0x2c] sm:$0xf]
    %v163 = vld [vmem:[#allocation7 + $0x30] sm:$0xf]
    %v164 = vld [vmem:[#allocation7 + $0x34] sm:$0xf]
    %v165 = vld [vmem:[#allocation7 + $0x38] sm:$0xf]
    %v166 = vld [vmem:[#allocation7 + $0x3c] sm:$0xf]
    %v167 = vld [vmem:[%s4] sm:$0x1]
    %v169 = vperm.slane %v167, 0
    %v187 = vunpack.c.l.b16 %v151
    %v188 = vunpack.c.l.b16 %v152
    %v189 = vunpack.c.l.b16 %v153
    %v190 = vunpack.c.l.b16 %v154
    %v191 = vunpack.c.l.b16 %v155
    %v192 = vunpack.c.l.b16 %v156
    %v193 = vunpack.c.l.b16 %v157
    %v194 = vunpack.c.l.b16 %v158
    %v195 = vunpack.c.l.b16 %v159
    %v196 = vunpack.c.l.b16 %v160
    %v197 = vunpack.c.l.b16 %v161
    %v198 = vunpack.c.l.b16 %v162
    %v199 = vunpack.c.l.b16 %v163
    %v200 = vunpack.c.l.b16 %v164
    %v201 = vunpack.c.l.b16 %v165
    %v202 = vunpack.c.l.b16 %v166
    %v203 = vpack.c.b16 %v188, %v187
    %v204 = vpack.c.b16 %v190, %v189
    %v205 = vpack.c.b16 %v192, %v191
    %v206 = vpack.c.b16 %v194, %v193
    %v207 = vpack.c.b16 %v196, %v195
    %v208 = vpack.c.b16 %v198, %v197
    %v209 = vpack.c.b16 %v200, %v199
    %v210 = vpack.c.b16 %v202, %v201
    %219 = vmatpush.bf16.msra.mxu0 %v210
    %220 = vmatpush.bf16.msra.mxu0 %v209
    %221 = vmatpush.bf16.msra.mxu0 %v208
    %222 = vmatpush.bf16.msra.mxu0 %v207
    %223 = vmatpush.bf16.msra.mxu0 %v206
    %224 = vmatpush.bf16.msra.mxu0 %v205
    %225 = vmatpush.bf16.msra.mxu0 %v204
    %226 = vmatpush.bf16.msra.mxu0 %v203
    %227 = vmatmul.bf16.gmra.mxu0 %v150
    %v228 = vpop.f32.mrf.mxu0
    %v229 = vadd.f32 %v169, %v228
    %v230 = vpop.f32.mrf.mxu0
    %231 = vdwg.mxu0
    %232 = vst [vmem:[#allocation8] sm:$0xff] %v229
    // Predicated region
    $region34: #{tpu_custom_call.1} parent=1 // pred_check
      _
    $region35: #{tpu_custom_call.1} parent=1 // pred_check_branch
      %234 = sbr.rel (0) target = $region37
    $region36: #{tpu_custom_call.1} parent=1 // pred_region
      %236 = vsyncadd [#allocation4], 0
      %s238 = sshll.u32 [#allocation8], 4
      %s239 = int_to_ptr.vmem [resolvable:$true] %s238
      %s240 = sshll.u32 %s5, 4
      %s241 = int_to_ptr.hbm [resolvable:$true] %s240
      %243 = dma.vmem_to_hbm [thread:$0]  %s239, 128, %s241, [#allocation4]
    $region37: #{tpu_custom_call.1} parent=1 // pred_fallthru
      _
    // Predicated region
    $region38: #{tpu_custom_call.1} parent=1 // pred_check
      _
    $region39: #{tpu_custom_call.1} parent=1 // pred_check_branch
      %245 = sbr.rel (0) target = $region41
    $region40: #{tpu_custom_call.1} parent=1 // pred_region
      %247 = dma.done [#allocation4], 128
    $region41: #{tpu_custom_call.1} parent=1 // pred_fallthru
      _
    %248 = vsyncpa [#allocation3], 1
    %249 = vsyncpa [#allocation6], 1
    %250 = vsyncpa [#allocation4], 1

// kernel: tpu_custom_call.1
$region0: #{tpu_custom_call.1}
  #allocation0 [shape = 'u32[]', space=smem, size = 0x4, offset = 0x4, fixed_abs, tag = 'smem constant byte address 0x4 - core index']
  #allocation1 [shape = 'u32[72,128]{1,0:T(1,128)}', space=vmem, size = 0x9000, scoped, tag = 'internal scratch']
  %s0 = inlined_call_operand.hbm [shape: f32[8,128], index: 0, kind: input, shape index: {}]
  %s1 = inlined_call_operand.hbm [shape: bf16[128,128], index: 1, kind: input, shape index: {}]
  %s2 = inlined_call_operand.vmem [shape: f32[1,128], index: 2, kind: input, shape index: {}]
  %s3 = inlined_call_operand.hbm [shape: bf16[128,128], index: 3, kind: input, shape index: {}]
  %s4 = inlined_call_operand.vmem [shape: f32[1,128], index: 4, kind: input, shape index: {}]
  %s5 = inlined_call_operand.hbm [shape: f32[8,128], index: 5, kind: output, shape index: {}]
  %s6 = sld [smem:[#allocation0]]
  $region42: #{tpu_custom_call.1} parent=0
    _
  %s8 = ssub.s32 1, %s6
  %s9 = scalar_select 0, %s8, %s6
  $region1: #{tpu_custom_call.1} parent=0
    #allocation2 [shape = 'u8[4096]{0}', space=vmem, size = 0x1000, scoped, tag = 'input window, operand 0, single buffered']
    #allocation3 [shape = 's32[1]{0}', space=sflag, size = 0x4, scoped, tag = 'scoped memory for tpu_custom_call.1']
    #allocation4 [shape = 's32[1]{0}', space=sflag, size = 0x4, scoped, tag = 'scoped memory for tpu_custom_call.1']
    #allocation5 [shape = 'u8[32768]{0}', space=vmem, size = 0x8000, scoped, tag = 'input window, operand 1, single buffered']
    #allocation6 [shape = 's32[1]{0}', space=sflag, size = 0x4, scoped, tag = 'scoped memory for tpu_custom_call.1']
    #allocation7 [shape = 'u8[32768]{0}', space=vmem, size = 0x8000, scoped, tag = 'input window, operand 3, single buffered']
    #allocation8 [shape = 'u8[4096]{0}', space=vmem, size = 0x1000, scoped, tag = 'output window, operand 0, single buffered']
    %10 = vsyncpa [#allocation3], 0
    %11 = vsyncpa [#allocation6], 0
    %12 = vsyncpa [#allocation4], 0
    // Predicated region
    $region2: #{tpu_custom_call.1} parent=1 // pred_check
      _
    $region3: #{tpu_custom_call.1} parent=1 // pred_check_branch
      %14 = sbr.rel (0) target = $region5
    $region4: #{tpu_custom_call.1} parent=1 // pred_region
      %16 = vsyncadd [#allocation3], 0
      %s18 = sshll.u32 %s0, 4
      %s19 = int_to_ptr.hbm [resolvable:$true] %s18
      %s20 = sshll.u32 [#allocation2], 4
      %s21 = int_to_ptr.vmem [resolvable:$true] %s20
      %23 = dma.hbm_to_vmem [thread:$0]  %s19, 128, %s21, [#allocation3]
    $region5: #{tpu_custom_call.1} parent=1 // pred_fallthru
      _
    // Predicated region
    $region6: #{tpu_custom_call.1} parent=1 // pred_check
      _
    $region7: #{tpu_custom_call.1} parent=1 // pred_check_branch
      %25 = sbr.rel (0) target = $region9
    $region8: #{tpu_custom_call.1} parent=1 // pred_region
      %27 = vsyncadd [#allocation6], 0
      %s28 = sshll.u32 %s1, 4
      %s29 = int_to_ptr.hbm [resolvable:$true] %s28
      %s30 = sshll.u32 [#allocation5], 4
      %s31 = int_to_ptr.vmem [resolvable:$true] %s30
      %36 = dma.hbm_to_vmem [thread:$0]  %s29, 1024, %s31, [#allocation6], 64, 64, 4
    $region9: #{tpu_custom_call.1} parent=1 // pred_fallthru
      _
    // Predicated region
    $region10: #{tpu_custom_call.1} parent=1 // pred_check
      _
    $region11: #{tpu_custom_call.1} parent=1 // pred_check_branch
      %38 = sbr.rel (0) target = $region13
    $region12: #{tpu_custom_call.1} parent=1 // pred_region
      _
    $region13: #{tpu_custom_call.1} parent=1 // pred_fallthru
      _
    // Predicated region
    $region14: #{tpu_custom_call.1} parent=1 // pred_check
      _
    $region15: #{tpu_custom_call.1} parent=1 // pred_check_branch
      %40 = sbr.rel (0) target = $region17
    $region16: #{tpu_custom_call.1} parent=1 // pred_region
      %42 = vsyncadd [#allocation6], 0
      %s43 = sshll.u32 %s3, 4
      %s44 = int_to_ptr.hbm [resolvable:$true] %s43
      %s45 = sshll.u32 [#allocation7], 4
      %s46 = int_to_ptr.vmem [resolvable:$true] %s45
      %51 = dma.hbm_to_vmem [thread:$0]  %s44, 1024, %s46, [#allocation6], 64, 64, 4
    $region17: #{tpu_custom_call.1} parent=1 // pred_fallthru
      _
    // Predicated region
    $region18: #{tpu_custom_call.1} parent=1 // pred_check
      _
    $region19: #{tpu_custom_call.1} parent=1 // pred_check_branch
      %53 = sbr.rel (0) target = $region21
    $region20: #{tpu_custom_call.1} parent=1 // pred_region
      _
    $region21: #{tpu_custom_call.1} parent=1 // pred_fallthru
      _
    // Predicated region
    $region22: #{tpu_custom_call.1} parent=1 // pred_check
      _
    $region23: #{tpu_custom_call.1} parent=1 // pred_check_branch
      %55 = sbr.rel (0) target = $region25
    $region24: #{tpu_custom_call.1} parent=1 // pred_region
      %57 = dma.done [#allocation3], 128
    $region25: #{tpu_custom_call.1} parent=1 // pred_fallthru
      _
    // Predicated region
    $region26: #{tpu_custom_call.1} parent=1 // pred_check
      _
    $region27: #{tpu_custom_call.1} parent=1 // pred_check_branch
      %59 = sbr.rel (0) target = $region29
    $region28: #{tpu_custom_call.1} parent=1 // pred_region
      %61 = dma.done [#allocation6], 1024
    $region29: #{tpu_custom_call.1} parent=1 // pred_fallthru
      _
    // Predicated region
    $region30: #{tpu_custom_call.1} parent=1 // pred_check
      _
    $region31: #{tpu_custom_call.1} parent=1 // pred_check_branch
      %63 = sbr.rel (0) target = $region33
    $region32: #{tpu_custom_call.1} parent=1 // pred_region
      %65 = dma.done [#allocation6], 1024
    $region33: #{tpu_custom_call.1} parent=1 // pred_fallthru
      _
    %v66 = vld [vmem:[#allocation2] sm:$0xff]
    %v67 = vld [vmem:[#allocation5] sm:$0xf]
    %v68 = vld [vmem:[#allocation5 + $0x4] sm:$0xf]
    %v69 = vld [vmem:[#allocation5 + $0x8] sm:$0xf]
    %v70 = vld [vmem:[#allocation5 + $0xc] sm:$0xf]
    %v71 = vld [vmem:[#allocation5 + $0x10] sm:$0xf]
    %v72 = vld [vmem:[#allocation5 + $0x14] sm:$0xf]
    %v73 = vld [vmem:[#allocation5 + $0x18] sm:$0xf]
    %v74 = vld [vmem:[#allocation5 + $0x1c] sm:$0xf]
    %v75 = vld [vmem:[#allocation5 + $0x20] sm:$0xf]
    %v76 = vld [vmem:[#allocation5 + $0x24] sm:$0xf]
    %v77 = vld [vmem:[#allocation5 + $0x28] sm:$0xf]
    %v78 = vld [vmem:[#allocation5 + $0x2c] sm:$0xf]
    %v79 = vld [vmem:[#allocation5 + $0x30] sm:$0xf]
    %v80 = vld [vmem:[#allocation5 + $0x34] sm:$0xf]
    %v81 = vld [vmem:[#allocation5 + $0x38] sm:$0xf]
    %v82 = vld [vmem:[#allocation5 + $0x3c] sm:$0xf]
    %v83 = vld [vmem:[%s2] sm:$0x1]
    %v84 = vpack.c.bf16 %v66, %v66
    %v86 = vperm.slane %v83, 0
    %v104 = vunpack.c.l.b16 %v67
    %v105 = vunpack.c.l.b16 %v68
    %v106 = vunpack.c.l.b16 %v69
    %v107 = vunpack.c.l.b16 %v70
    %v108 = vunpack.c.l.b16 %v71
    %v109 = vunpack.c.l.b16 %v72
    %v110 = vunpack.c.l.b16 %v73
    %v111 = vunpack.c.l.b16 %v74
    %v112 = vunpack.c.l.b16 %v75
    %v113 = vunpack.c.l.b16 %v76
    %v114 = vunpack.c.l.b16 %v77
    %v115 = vunpack.c.l.b16 %v78
    %v116 = vunpack.c.l.b16 %v79
    %v117 = vunpack.c.l.b16 %v80
    %v118 = vunpack.c.l.b16 %v81
    %v119 = vunpack.c.l.b16 %v82
    %v120 = vpack.c.b16 %v105, %v104
    %v121 = vpack.c.b16 %v107, %v106
    %v122 = vpack.c.b16 %v109, %v108
    %v123 = vpack.c.b16 %v111, %v110
    %v124 = vpack.c.b16 %v113, %v112
    %v125 = vpack.c.b16 %v115, %v114
    %v126 = vpack.c.b16 %v117, %v116
    %v127 = vpack.c.b16 %v119, %v118
    %136 = vmatpush.bf16.msra.mxu0 %v127
    %137 = vmatpush.bf16.msra.mxu0 %v126
    %138 = vmatpush.bf16.msra.mxu0 %v125
    %139 = vmatpush.bf16.msra.mxu0 %v124
    %140 = vmatpush.bf16.msra.mxu0 %v123
    %141 = vmatpush.bf16.msra.mxu0 %v122
    %142 = vmatpush.bf16.msra.mxu0 %v121
    %143 = vmatpush.bf16.msra.mxu0 %v120
    %144 = vmatmul.bf16.gmra.mxu0 %v84
    %v145 = vpop.f32.mrf.mxu0
    %v146 = vadd.f32 %v86, %v145
    %v147 = vpop.f32.mrf.mxu0
    %148 = vdwg.mxu0
    %v149 = vmax.f32 %v146, 0.0
    %v150 = vpack.c.bf16 %v149, %v149
    %v151 = vld [vmem:[#allocation7] sm:$0xf]
    %v152 = vld [vmem:[#allocation7 + $0x4] sm:$0xf]
    %v153 = vld [vmem:[#allocation7 + $0x8] sm:$0xf]
    %v154 = vld [vmem:[#allocation7 + $0xc] sm:$0xf]
    %v155 = vld [vmem:[#allocation7 + $0x10] sm:$0xf]
    %v156 = vld [vmem:[#allocation7 + $0x14] sm:$0xf]
    %v157 = vld [vmem:[#allocation7 + $0x18] sm:$0xf]
    %v158 = vld [vmem:[#allocation7 + $0x1c] sm:$0xf]
    %v159 = vld [vmem:[#allocation7 + $0x20] sm:$0xf]
    %v160 = vld [vmem:[#allocation7 + $0x24] sm:$0xf]
    %v161 = vld [vmem:[#allocation7 + $0x28] sm:$0xf]
    %v162 = vld [vmem:[#allocation7 + $0x2c] sm:$0xf]
    %v163 = vld [vmem:[#allocation7 + $0x30] sm:$0xf]
    %v164 = vld [vmem:[#allocation7 + $0x34] sm:$0xf]
    %v165 = vld [vmem:[#allocation7 + $0x38] sm:$0xf]
    %v166 = vld [vmem:[#allocation7 + $0x3c] sm:$0xf]
    %v167 = vld [vmem:[%s4] sm:$0x1]
    %v169 = vperm.slane %v167, 0
    %v187 = vunpack.c.l.b16 %v151
    %v188 = vunpack.c.l.b16 %v152
    %v189 = vunpack.c.l.b16 %v153
    %v190 = vunpack.c.l.b16 %v154
    %v191 = vunpack.c.l.b16 %v155
    %v192 = vunpack.c.l.b16 %v156
    %v193 = vunpack.c.l.b16 %v157
    %v194 = vunpack.c.l.b16 %v158
    %v195 = vunpack.c.l.b16 %v159
    %v196 = vunpack.c.l.b16 %v160
    %v197 = vunpack.c.l.b16 %v161
    %v198 = vunpack.c.l.b16 %v162
    %v199 = vunpack.c.l.b16 %v163
    %v200 = vunpack.c.l.b16 %v164
    %v201 = vunpack.c.l.b16 %v165
    %v202 = vunpack.c.l.b16 %v166
    %v203 = vpack.c.b16 %v188, %v187
    %v204 = vpack.c.b16 %v190, %v189
    %v205 = vpack.c.b16 %v192, %v191
    %v206 = vpack.c.b16 %v194, %v193
    %v207 = vpack.c.b16 %v196, %v195
    %v208 = vpack.c.b16 %v198, %v197
    %v209 = vpack.c.b16 %v200, %v199
    %v210 = vpack.c.b16 %v202, %v201
    %219 = vmatpush.bf16.msra.mxu0 %v210
    %220 = vmatpush.bf16.msra.mxu0 %v209
    %221 = vmatpush.bf16.msra.mxu0 %v208
    %222 = vmatpush.bf16.msra.mxu0 %v207
    %223 = vmatpush.bf16.msra.mxu0 %v206
    %224 = vmatpush.bf16.msra.mxu0 %v205
    %225 = vmatpush.bf16.msra.mxu0 %v204
    %226 = vmatpush.bf16.msra.mxu0 %v203
    %227 = vmatmul.bf16.gmra.mxu0 %v150
    %v228 = vpop.f32.mrf.mxu0
    %v229 = vadd.f32 %v169, %v228
    %v230 = vpop.f32.mrf.mxu0
    %231 = vdwg.mxu0
    %232 = vst [vmem:[#allocation8] sm:$0xff] %v229
    // Predicated region
    $region34: #{tpu_custom_call.1} parent=1 // pred_check
      _
    $region35: #{tpu_custom_call.1} parent=1 // pred_check_branch
      %234 = sbr.rel (0) target = $region37
    $region36: #{tpu_custom_call.1} parent=1 // pred_region
      %236 = vsyncadd [#allocation4], 0
      %s238 = sshll.u32 [#allocation8], 4
      %s239 = int_to_ptr.vmem [resolvable:$true] %s238
      %s240 = sshll.u32 %s5, 4
      %s241 = int_to_ptr.hbm [resolvable:$true] %s240
      %243 = dma.vmem_to_hbm [thread:$0]  %s239, 128, %s241, [#allocation4]
    $region37: #{tpu_custom_call.1} parent=1 // pred_fallthru
      _
    // Predicated region
    $region38: #{tpu_custom_call.1} parent=1 // pred_check
      _
    $region39: #{tpu_custom_call.1} parent=1 // pred_check_branch
      %245 = sbr.rel (0) target = $region41
    $region40: #{tpu_custom_call.1} parent=1 // pred_region
      %247 = dma.done [#allocation4], 128
    $region41: #{tpu_custom_call.1} parent=1 // pred_fallthru
      _
    %248 = vsyncpa [#allocation3], 1
    %249 = vsyncpa [#allocation6], 1
    %250 = vsyncpa [#allocation4], 1

</llo_original>
